<compile_context>
chip_gen: v5e
topology: v5e:2x2
jax: 0.10.0
libtpu: 0.0.40
codegen_flags: <defaults>
</compile_context>

<pallas_src>
import jax
import jax.numpy as jnp
from jax.experimental import pallas as pl
from jax.experimental.pallas import tpu as pltpu

BN_EPS = 1e-5   # nn.BatchNorm1d default
LANE = 128


def _round_up(n, m):
    return ((n + m - 1) // m) * m


def _bn_relu(y, g, be):
    """Training-mode BatchNorm1d (batch stats) + ReLU, all in f32.

    One-pass variance E[y^2]-mean^2 (single reduction pass), clamped at 0;
    acceptable here since activations are O(1) after each normalization.
    Padded (all-zero) feature columns stay exactly zero because gamma/beta
    padding is zero (a = g*inv = 0, c = 0)."""
    mean = jnp.mean(y, axis=0, keepdims=True)                                 # (1,H)
    var = jnp.maximum(jnp.mean(y * y, axis=0, keepdims=True) - mean * mean, 0.0)
    inv = jax.lax.rsqrt(var + BN_EPS)
    a = g * inv
    c = be - mean * a
    return jnp.maximum(y * a + c, 0.0)


def default_model_kernel(x_ref, w1_ref, vec_ref, wstack_hbm, o_ref, wbuf, sem):
    """Whole DefaultModel forward in one invocation.

    x_ref      : (B, in_len)  f32   VMEM
    w1_ref     : (in_len, H)  bf16  VMEM   layer-1 weight, pre-transposed/padded
    vec_ref    : (16, H)      f32   VMEM   rows: g1,be1,g2,be2,g3,be3,g4,be4,b5
    wstack_hbm : (4, H, H)    bf16  HBM    w2^T,w3^T,w4^T,w5^T (padded)
    o_ref      : (B, out_len) f32
    wbuf       : (2, H, H)    bf16  VMEM scratch (double buffer)
    sem        : DMA semaphores (2,)
    """
    # Kick off the layer-2 weight DMA immediately; it overlaps layer-1 compute.
    pltpu.make_async_copy(wstack_hbm.at[0], wbuf.at[0], sem.at[0]).start()

    vec = vec_ref[...]                                  # (16,H) f32, single load

    # ---- layer 1: Linear(in_len -> 2*in_len) + BN + ReLU --------------------
    h = x_ref[...]                                      # (B, in_len) f32
    y = jnp.dot(h.astype(jnp.bfloat16), w1_ref[...],
                preferred_element_type=jnp.float32)
    h = _bn_relu(y, vec[0:1, :], vec[1:2, :])

    # ---- layers 2..4: double-buffered weight prefetch -----------------------
    for i in range(3):                                  # wstack index i -> layer i+2
        slot = i & 1
        pltpu.make_async_copy(wstack_hbm.at[i], wbuf.at[slot], sem.at[slot]).wait()
        nxt = i + 1
        pltpu.make_async_copy(wstack_hbm.at[nxt], wbuf.at[1 - slot],
                              sem.at[1 - slot]).start()
        y = jnp.dot(h.astype(jnp.bfloat16), wbuf[slot],
                    preferred_element_type=jnp.float32)
        l = i + 1                                       # 0-based layer index
        h = _bn_relu(y, vec[2 * l:2 * l + 1, :], vec[2 * l + 1:2 * l + 2, :])

    # ---- final Linear(2*in_len -> out_len): no BN / ReLU ---------------------
    slot = 3 & 1
    pltpu.make_async_copy(wstack_hbm.at[3], wbuf.at[slot], sem.at[slot]).wait()
    y = jnp.dot(h.astype(jnp.bfloat16), wbuf[slot],
                preferred_element_type=jnp.float32) + vec[8:9, :]
    # Store the real columns directly (tiny masked vst) -> no wrapper slice op.
    o_ref[...] = y[:, :o_ref.shape[1]].astype(o_ref.dtype)


def init_params(key, in_len, out_len):
    """PyTorch-layout parameters for DefaultModel (Linear weights are (out,in))."""
    dims = [in_len, 2 * in_len, 3 * in_len, 3 * in_len, 2 * in_len, out_len]
    keys = jax.random.split(key, 10)
    params = []
    for i in range(4):
        bound = 1.0 / (dims[i] ** 0.5)
        w = jax.random.uniform(keys[2 * i], (dims[i + 1], dims[i]), jnp.float32, -bound, bound)
        b = jax.random.uniform(keys[2 * i + 1], (dims[i + 1],), jnp.float32, -bound, bound)
        g = jnp.ones((dims[i + 1],), jnp.float32)     # BatchNorm1d gamma
        be = jnp.zeros((dims[i + 1],), jnp.float32)   # BatchNorm1d beta
        params.append((w, b, g, be))
    bound = 1.0 / (dims[4] ** 0.5)
    w5 = jax.random.uniform(keys[8], (out_len, dims[4]), jnp.float32, -bound, bound)
    b5 = jax.random.uniform(keys[9], (out_len,), jnp.float32, -bound, bound)
    params.append((w5, b5))
    return params


def prepare_params(params, in_len, out_len):
    """One-time prep (NOT on the per-call hot path):
       - transpose every nn.Linear weight (out,in) -> (in,out),
       - zero-pad all hidden/output feature dims to a single lane multiple H,
       - drop b1..b4 (cancelled exactly by training-mode BatchNorm),
       - cast matmul weights to bf16; keep the BN/bias vector slab in f32,
       - pack layer 2..5 weights into one (4,H,H) slab and all vectors into
         one (16,H) slab.
       Padded rows/cols/vectors are exactly zero -> padded activations stay zero."""
    dims = [in_len, 2 * in_len, 3 * in_len, 3 * in_len, 2 * in_len, out_len]
    H = max(_round_up(d, LANE) for d in dims[1:])

    # Layer-1 weight (kept separate: its K dim is the unpadded input length).
    w1 = params[0][0]
    w1p = (jnp.zeros((in_len, H), jnp.float32)
           .at[:, :dims[1]].set(w1.T).astype(jnp.bfloat16))

    # Stacked, transposed, padded weights for layers 2..5.
    wstack = jnp.zeros((4, H, H), jnp.float32)
    for i in range(1, 4):
        w = params[i][0]
        wstack = wstack.at[i - 1, :dims[i], :dims[i + 1]].set(w.T)
    w5, b5 = params[4]
    wstack = wstack.at[3, :dims[4], :dims[5]].set(w5.T)
    wstack = wstack.astype(jnp.bfloat16)

    # Vector slab: rows 0..7 = (g,be) x 4 layers; row 8 = b5; rest zero.
    vec = jnp.zeros((16, H), jnp.float32)
    for i in range(4):
        _, _, g, be = params[i]
        vec = vec.at[2 * i, :dims[i + 1]].set(g)
        vec = vec.at[2 * i + 1, :dims[i + 1]].set(be)
    vec = vec.at[8, :dims[5]].set(b5)

    return w1p, vec, wstack


def default_model_forward(x, prepped, out_len):
    """x: (B, in_len) f32. Returns (B, out_len) f32 (training-mode forward)."""
    w1p, vec, wstack = prepped
    B = x.shape[0]
    H = w1p.shape[1]

    def full(shape):
        return pl.BlockSpec(shape, lambda: (0,) * len(shape))

    return pl.pallas_call(
        default_model_kernel,
        out_shape=jax.ShapeDtypeStruct((B, out_len), jnp.float32),
        grid=(),
        in_specs=[full(x.shape),              # x            (VMEM)
                  full(w1p.shape),            # w1 (bf16)    (VMEM)
                  full(vec.shape),            # vector slab  (VMEM)
                  pl.BlockSpec(memory_space=pl.ANY)],   # weight stack stays in HBM
        out_specs=full((B, out_len)),
        scratch_shapes=[pltpu.VMEM((2, H, H), jnp.bfloat16),
                        pltpu.SemaphoreType.DMA((2,))],
    )(x, w1p, vec, wstack)


def reference_forward(x, params):
    """Pure-JAX f32 reference mirroring the PyTorch training-mode forward."""
    h = x
    for (w, b, g, be) in params[:4]:
        y = h @ w.T + b
        mean = jnp.mean(y, axis=0, keepdims=True)
        var = jnp.mean((y - mean) ** 2, axis=0, keepdims=True)
        h = jnp.maximum((y - mean) / jnp.sqrt(var + BN_EPS) * g + be, 0.0)
    w5, b5 = params[4]
    return h @ w5.T + b5


if __name__ == "__main__":
    # Small shapes consistent with DefaultModel(in_len, out_len): hidden dims are
    # 2*in_len and 3*in_len.  batch=8, in_len=32, out_len=4.
    B, in_len, out_len = 8, 32, 4
    key = jax.random.PRNGKey(0)
    kx, kp = jax.random.split(key)

    x = jax.random.normal(kx, (B, in_len), dtype=jnp.float32)
    params = init_params(kp, in_len, out_len)          # PyTorch-layout params
    prepped = prepare_params(params, in_len, out_len)  # one-time transpose/pad/pack/bf16

    out = default_model_forward(x, prepped, out_len)
    jax.block_until_ready(out)

    # Correctness check against a pure-JAX f32 training-mode reference.
    # Matmul operands are bf16 on the MXU (f32 accumulate), so expect ~1e-2-level
    # divergence from the all-f32 reference; structure validated at 5e-2.
    ref = reference_forward(x, params)
    assert out.shape == (B, out_len)
    err = float(jnp.max(jnp.abs(out - ref)))
    assert jnp.allclose(out, ref, rtol=5e-2, atol=5e-2), err

    print("KERNEL_OK")
</pallas_src>

<mosaic_0001>
module attributes {stable_mosaic.version = 11 : i64} {
  func.func @default_model_kernel(%arg0: memref<8x32xf32, #tpu.memory_space<vmem>>, %arg1: memref<32x128xbf16, #tpu.memory_space<vmem>>, %arg2: memref<16x128xf32, #tpu.memory_space<vmem>>, %arg3: memref<4x128x128xbf16, #tpu.memory_space<any>>, %arg4: memref<8x4xf32, #tpu.memory_space<vmem>>, %arg5: memref<2x128x128xbf16, #tpu.memory_space<vmem>>, %arg6: memref<2x!tpu.dma_semaphore, #tpu.memory_space<semaphore_mem>>) attributes {dimension_semantics = [], scalar_prefetch = 0 : i64, scratch_operands = 2 : i64, tpu.core_type = #tpu.core_type<tc>} {
    %c0_i32 = arith.constant 0 : i32
    %c0_i32_0 = arith.constant 0 : i32
    %c0_i32_1 = arith.constant 0 : i32
    %c0_i32_2 = arith.constant 0 : i32
    %c0_i32_3 = arith.constant 0 : i32
    %0 = tpu.memref_slice %arg3[%c0_i32, %c0_i32_2, %c0_i32_3] : memref<4x128x128xbf16, #tpu.memory_space<any>> -> memref<1x128x128xbf16, #tpu.memory_space<any>>
    %1 = tpu.memref_squeeze %0 : memref<1x128x128xbf16, #tpu.memory_space<any>> -> memref<128x128xbf16, #tpu.memory_space<any>>
    %c0_i32_4 = arith.constant 0 : i32
    %c0_i32_5 = arith.constant 0 : i32
    %2 = tpu.memref_slice %arg5[%c0_i32_0, %c0_i32_4, %c0_i32_5] : memref<2x128x128xbf16, #tpu.memory_space<vmem>> -> memref<1x128x128xbf16, #tpu.memory_space<vmem>>
    %3 = tpu.memref_squeeze %2 : memref<1x128x128xbf16, #tpu.memory_space<vmem>> -> memref<128x128xbf16, #tpu.memory_space<vmem>>
    %4 = tpu.memref_slice %arg6[%c0_i32_1] : memref<2x!tpu.dma_semaphore, #tpu.memory_space<semaphore_mem>> -> memref<1x!tpu.dma_semaphore, #tpu.memory_space<semaphore_mem>>
    %5 = tpu.memref_squeeze %4 : memref<1x!tpu.dma_semaphore, #tpu.memory_space<semaphore_mem>> -> memref<!tpu.dma_semaphore, #tpu.memory_space<semaphore_mem>>
    tpu.enqueue_dma source(%1 : memref<128x128xbf16, #tpu.memory_space<any>>) target(%3 : memref<128x128xbf16, #tpu.memory_space<vmem>>) target_semaphore(%5 : memref<!tpu.dma_semaphore, #tpu.memory_space<semaphore_mem>>)
    %c0 = arith.constant 0 : index
    %c0_6 = arith.constant 0 : index
    %6 = vector.load %arg2[%c0, %c0_6] : memref<16x128xf32, #tpu.memory_space<vmem>>, vector<16x128xf32>
    %c0_7 = arith.constant 0 : index
    %c0_8 = arith.constant 0 : index
    %7 = vector.load %arg0[%c0_7, %c0_8] : memref<8x32xf32, #tpu.memory_space<vmem>>, vector<8x32xf32>
    %8 = arith.truncf %7 : vector<8x32xf32> to vector<8x32xbf16>
    %c0_9 = arith.constant 0 : index
    %c0_10 = arith.constant 0 : index
    %9 = vector.load %arg1[%c0_9, %c0_10] : memref<32x128xbf16, #tpu.memory_space<vmem>>, vector<32x128xbf16>
    %cst = arith.constant dense<0.000000e+00> : vector<8x128xf32>
    %10 = tpu.matmul %8, %9, %cst {dimension_numbers = #tpu.dot_dimension_numbers<[1], [0], [0], [1], [0, 0, 1, 1], [], []>} : vector<8x32xbf16>, vector<32x128xbf16>, vector<8x128xf32> -> vector<8x128xf32>
    %11 = vector.extract_strided_slice %6 {offsets = [0, 0], sizes = [1, 128], strides = [1, 1]} : vector<16x128xf32> to vector<1x128xf32>
    %12 = vector.extract_strided_slice %6 {offsets = [1, 0], sizes = [1, 128], strides = [1, 1]} : vector<16x128xf32> to vector<1x128xf32>
    %cst_11 = arith.constant dense<0.000000e+00> : vector<128xf32>
    %13 = vector.multi_reduction <add>, %10, %cst_11 [0] : vector<8x128xf32> to vector<128xf32>
    %14 = vector.shape_cast %13 : vector<128xf32> to vector<1x128xf32>
    %cst_12 = arith.constant 8.000000e+00 : f32
    %15 = vector.broadcast %cst_12 : f32 to vector<1x128xf32>
    %16 = arith.divf %14, %15 : vector<1x128xf32>
    %17 = arith.mulf %10, %10 : vector<8x128xf32>
    %cst_13 = arith.constant dense<0.000000e+00> : vector<128xf32>
    %18 = vector.multi_reduction <add>, %17, %cst_13 [0] : vector<8x128xf32> to vector<128xf32>
    %19 = vector.shape_cast %18 : vector<128xf32> to vector<1x128xf32>
    %cst_14 = arith.constant 8.000000e+00 : f32
    %20 = vector.broadcast %cst_14 : f32 to vector<1x128xf32>
    %21 = arith.divf %19, %20 : vector<1x128xf32>
    %22 = arith.mulf %16, %16 : vector<1x128xf32>
    %23 = arith.subf %21, %22 : vector<1x128xf32>
    %cst_15 = arith.constant 0.000000e+00 : f32
    %24 = vector.broadcast %cst_15 : f32 to vector<1x128xf32>
    %25 = arith.maximumf %23, %24 : vector<1x128xf32>
    %cst_16 = arith.constant 9.99999974E-6 : f32
    %26 = vector.broadcast %cst_16 : f32 to vector<1x128xf32>
    %27 = arith.addf %25, %26 : vector<1x128xf32>
    %28 = math.rsqrt %27 : vector<1x128xf32>
    %29 = arith.mulf %11, %28 : vector<1x128xf32>
    %30 = arith.mulf %16, %29 : vector<1x128xf32>
    %31 = arith.subf %12, %30 : vector<1x128xf32>
    %32 = vector.broadcast %29 : vector<1x128xf32> to vector<8x128xf32>
    %33 = arith.mulf %10, %32 : vector<8x128xf32>
    %34 = vector.broadcast %31 : vector<1x128xf32> to vector<8x128xf32>
    %35 = arith.addf %33, %34 : vector<8x128xf32>
    %cst_17 = arith.constant 0.000000e+00 : f32
    %36 = vector.broadcast %cst_17 : f32 to vector<8x128xf32>
    %37 = arith.maximumf %35, %36 : vector<8x128xf32>
    %c0_i32_18 = arith.constant 0 : i32
    %c0_i32_19 = arith.constant 0 : i32
    %c0_i32_20 = arith.constant 0 : i32
    %c0_i32_21 = arith.constant 0 : i32
    %c0_i32_22 = arith.constant 0 : i32
    %38 = tpu.memref_slice %arg3[%c0_i32_18, %c0_i32_21, %c0_i32_22] : memref<4x128x128xbf16, #tpu.memory_space<any>> -> memref<1x128x128xbf16, #tpu.memory_space<any>>
    %39 = tpu.memref_squeeze %38 : memref<1x128x128xbf16, #tpu.memory_space<any>> -> memref<128x128xbf16, #tpu.memory_space<any>>
    %c0_i32_23 = arith.constant 0 : i32
    %c0_i32_24 = arith.constant 0 : i32
    %40 = tpu.memref_slice %arg5[%c0_i32_19, %c0_i32_23, %c0_i32_24] : memref<2x128x128xbf16, #tpu.memory_space<vmem>> -> memref<1x128x128xbf16, #tpu.memory_space<vmem>>
    %41 = tpu.memref_squeeze %40 : memref<1x128x128xbf16, #tpu.memory_space<vmem>> -> memref<128x128xbf16, #tpu.memory_space<vmem>>
    %42 = tpu.memref_slice %arg6[%c0_i32_20] : memref<2x!tpu.dma_semaphore, #tpu.memory_space<semaphore_mem>> -> memref<1x!tpu.dma_semaphore, #tpu.memory_space<semaphore_mem>>
    %43 = tpu.memref_squeeze %42 : memref<1x!tpu.dma_semaphore, #tpu.memory_space<semaphore_mem>> -> memref<!tpu.dma_semaphore, #tpu.memory_space<semaphore_mem>>
    tpu.wait_dma2 semaphore(%43 : memref<!tpu.dma_semaphore, #tpu.memory_space<semaphore_mem>>) src(%39 : memref<128x128xbf16, #tpu.memory_space<any>>) dst(%41 : memref<128x128xbf16, #tpu.memory_space<vmem>>)
    %c1_i32 = arith.constant 1 : i32
    %c1_i32_25 = arith.constant 1 : i32
    %c1_i32_26 = arith.constant 1 : i32
    %c0_i32_27 = arith.constant 0 : i32
    %c0_i32_28 = arith.constant 0 : i32
    %44 = tpu.memref_slice %arg3[%c1_i32, %c0_i32_27, %c0_i32_28] : memref<4x128x128xbf16, #tpu.memory_space<any>> -> memref<1x128x128xbf16, #tpu.memory_space<any>>
    %45 = tpu.memref_squeeze %44 : memref<1x128x128xbf16, #tpu.memory_space<any>> -> memref<128x128xbf16, #tpu.memory_space<any>>
    %c0_i32_29 = arith.constant 0 : i32
    %c0_i32_30 = arith.constant 0 : i32
    %46 = tpu.memref_slice %arg5[%c1_i32_25, %c0_i32_29, %c0_i32_30] : memref<2x128x128xbf16, #tpu.memory_space<vmem>> -> memref<1x128x128xbf16, #tpu.memory_space<vmem>>
    %47 = tpu.memref_squeeze %46 : memref<1x128x128xbf16, #tpu.memory_space<vmem>> -> memref<128x128xbf16, #tpu.memory_space<vmem>>
    %48 = tpu.memref_slice %arg6[%c1_i32_26] : memref<2x!tpu.dma_semaphore, #tpu.memory_space<semaphore_mem>> -> memref<1x!tpu.dma_semaphore, #tpu.memory_space<semaphore_mem>>
    %49 = tpu.memref_squeeze %48 : memref<1x!tpu.dma_semaphore, #tpu.memory_space<semaphore_mem>> -> memref<!tpu.dma_semaphore, #tpu.memory_space<semaphore_mem>>
    tpu.enqueue_dma source(%45 : memref<128x128xbf16, #tpu.memory_space<any>>) target(%47 : memref<128x128xbf16, #tpu.memory_space<vmem>>) target_semaphore(%49 : memref<!tpu.dma_semaphore, #tpu.memory_space<semaphore_mem>>)
    %50 = arith.truncf %37 : vector<8x128xf32> to vector<8x128xbf16>
    %c0_31 = arith.constant 0 : index
    %c0_32 = arith.constant 0 : index
    %c0_33 = arith.constant 0 : index
    %51 = vector.load %arg5[%c0_31, %c0_32, %c0_33] : memref<2x128x128xbf16, #tpu.memory_space<vmem>>, vector<1x128x128xbf16>
    %52 = vector.shape_cast %51 : vector<1x128x128xbf16> to vector<128x128xbf16>
    %cst_34 = arith.constant dense<0.000000e+00> : vector<8x128xf32>
    %53 = tpu.matmul %50, %52, %cst_34 {dimension_numbers = #tpu.dot_dimension_numbers<[1], [0], [0], [1], [0, 0, 1, 1], [], []>} : vector<8x128xbf16>, vector<128x128xbf16>, vector<8x128xf32> -> vector<8x128xf32>
    %54 = vector.extract_strided_slice %6 {offsets = [2, 0], sizes = [1, 128], strides = [1, 1]} : vector<16x128xf32> to vector<1x128xf32>
    %55 = vector.extract_strided_slice %6 {offsets = [3, 0], sizes = [1, 128], strides = [1, 1]} : vector<16x128xf32> to vector<1x128xf32>
    %cst_35 = arith.constant dense<0.000000e+00> : vector<128xf32>
    %56 = vector.multi_reduction <add>, %53, %cst_35 [0] : vector<8x128xf32> to vector<128xf32>
    %57 = vector.shape_cast %56 : vector<128xf32> to vector<1x128xf32>
    %cst_36 = arith.constant 8.000000e+00 : f32
    %58 = vector.broadcast %cst_36 : f32 to vector<1x128xf32>
    %59 = arith.divf %57, %58 : vector<1x128xf32>
    %60 = arith.mulf %53, %53 : vector<8x128xf32>
    %cst_37 = arith.constant dense<0.000000e+00> : vector<128xf32>
    %61 = vector.multi_reduction <add>, %60, %cst_37 [0] : vector<8x128xf32> to vector<128xf32>
    %62 = vector.shape_cast %61 : vector<128xf32> to vector<1x128xf32>
    %cst_38 = arith.constant 8.000000e+00 : f32
    %63 = vector.broadcast %cst_38 : f32 to vector<1x128xf32>
    %64 = arith.divf %62, %63 : vector<1x128xf32>
    %65 = arith.mulf %59, %59 : vector<1x128xf32>
    %66 = arith.subf %64, %65 : vector<1x128xf32>
    %cst_39 = arith.constant 0.000000e+00 : f32
    %67 = vector.broadcast %cst_39 : f32 to vector<1x128xf32>
    %68 = arith.maximumf %66, %67 : vector<1x128xf32>
    %cst_40 = arith.constant 9.99999974E-6 : f32
    %69 = vector.broadcast %cst_40 : f32 to vector<1x128xf32>
    %70 = arith.addf %68, %69 : vector<1x128xf32>
    %71 = math.rsqrt %70 : vector<1x128xf32>
    %72 = arith.mulf %54, %71 : vector<1x128xf32>
    %73 = arith.mulf %59, %72 : vector<1x128xf32>
    %74 = arith.subf %55, %73 : vector<1x128xf32>
    %75 = vector.broadcast %72 : vector<1x128xf32> to vector<8x128xf32>
    %76 = arith.mulf %53, %75 : vector<8x128xf32>
    %77 = vector.broadcast %74 : vector<1x128xf32> to vector<8x128xf32>
    %78 = arith.addf %76, %77 : vector<8x128xf32>
    %cst_41 = arith.constant 0.000000e+00 : f32
    %79 = vector.broadcast %cst_41 : f32 to vector<8x128xf32>
    %80 = arith.maximumf %78, %79 : vector<8x128xf32>
    %c1_i32_42 = arith.constant 1 : i32
    %c1_i32_43 = arith.constant 1 : i32
    %c1_i32_44 = arith.constant 1 : i32
    %c0_i32_45 = arith.constant 0 : i32
    %c0_i32_46 = arith.constant 0 : i32
    %81 = tpu.memref_slice %arg3[%c1_i32_42, %c0_i32_45, %c0_i32_46] : memref<4x128x128xbf16, #tpu.memory_space<any>> -> memref<1x128x128xbf16, #tpu.memory_space<any>>
    %82 = tpu.memref_squeeze %81 : memref<1x128x128xbf16, #tpu.memory_space<any>> -> memref<128x128xbf16, #tpu.memory_space<any>>
    %c0_i32_47 = arith.constant 0 : i32
    %c0_i32_48 = arith.constant 0 : i32
    %83 = tpu.memref_slice %arg5[%c1_i32_43, %c0_i32_47, %c0_i32_48] : memref<2x128x128xbf16, #tpu.memory_space<vmem>> -> memref<1x128x128xbf16, #tpu.memory_space<vmem>>
    %84 = tpu.memref_squeeze %83 : memref<1x128x128xbf16, #tpu.memory_space<vmem>> -> memref<128x128xbf16, #tpu.memory_space<vmem>>
    %85 = tpu.memref_slice %arg6[%c1_i32_44] : memref<2x!tpu.dma_semaphore, #tpu.memory_space<semaphore_mem>> -> memref<1x!tpu.dma_semaphore, #tpu.memory_space<semaphore_mem>>
    %86 = tpu.memref_squeeze %85 : memref<1x!tpu.dma_semaphore, #tpu.memory_space<semaphore_mem>> -> memref<!tpu.dma_semaphore, #tpu.memory_space<semaphore_mem>>
    tpu.wait_dma2 semaphore(%86 : memref<!tpu.dma_semaphore, #tpu.memory_space<semaphore_mem>>) src(%82 : memref<128x128xbf16, #tpu.memory_space<any>>) dst(%84 : memref<128x128xbf16, #tpu.memory_space<vmem>>)
    %c2_i32 = arith.constant 2 : i32
    %c0_i32_49 = arith.constant 0 : i32
    %c0_i32_50 = arith.constant 0 : i32
    %c0_i32_51 = arith.constant 0 : i32
    %c0_i32_52 = arith.constant 0 : i32
    %87 = tpu.memref_slice %arg3[%c2_i32, %c0_i32_51, %c0_i32_52] : memref<4x128x128xbf16, #tpu.memory_space<any>> -> memref<1x128x128xbf16, #tpu.memory_space<any>>
    %88 = tpu.memref_squeeze %87 : memref<1x128x128xbf16, #tpu.memory_space<any>> -> memref<128x128xbf16, #tpu.memory_space<any>>
    %c0_i32_53 = arith.constant 0 : i32
    %c0_i32_54 = arith.constant 0 : i32
    %89 = tpu.memref_slice %arg5[%c0_i32_49, %c0_i32_53, %c0_i32_54] : memref<2x128x128xbf16, #tpu.memory_space<vmem>> -> memref<1x128x128xbf16, #tpu.memory_space<vmem>>
    %90 = tpu.memref_squeeze %89 : memref<1x128x128xbf16, #tpu.memory_space<vmem>> -> memref<128x128xbf16, #tpu.memory_space<vmem>>
    %91 = tpu.memref_slice %arg6[%c0_i32_50] : memref<2x!tpu.dma_semaphore, #tpu.memory_space<semaphore_mem>> -> memref<1x!tpu.dma_semaphore, #tpu.memory_space<semaphore_mem>>
    %92 = tpu.memref_squeeze %91 : memref<1x!tpu.dma_semaphore, #tpu.memory_space<semaphore_mem>> -> memref<!tpu.dma_semaphore, #tpu.memory_space<semaphore_mem>>
    tpu.enqueue_dma source(%88 : memref<128x128xbf16, #tpu.memory_space<any>>) target(%90 : memref<128x128xbf16, #tpu.memory_space<vmem>>) target_semaphore(%92 : memref<!tpu.dma_semaphore, #tpu.memory_space<semaphore_mem>>)
    %93 = arith.truncf %80 : vector<8x128xf32> to vector<8x128xbf16>
    %c1 = arith.constant 1 : index
    %c0_55 = arith.constant 0 : index
    %c0_56 = arith.constant 0 : index
    %94 = vector.load %arg5[%c1, %c0_55, %c0_56] : memref<2x128x128xbf16, #tpu.memory_space<vmem>>, vector<1x128x128xbf16>
    %95 = vector.shape_cast %94 : vector<1x128x128xbf16> to vector<128x128xbf16>
    %cst_57 = arith.constant dense<0.000000e+00> : vector<8x128xf32>
    %96 = tpu.matmul %93, %95, %cst_57 {dimension_numbers = #tpu.dot_dimension_numbers<[1], [0], [0], [1], [0, 0, 1, 1], [], []>} : vector<8x128xbf16>, vector<128x128xbf16>, vector<8x128xf32> -> vector<8x128xf32>
    %97 = vector.extract_strided_slice %6 {offsets = [4, 0], sizes = [1, 128], strides = [1, 1]} : vector<16x128xf32> to vector<1x128xf32>
    %98 = vector.extract_strided_slice %6 {offsets = [5, 0], sizes = [1, 128], strides = [1, 1]} : vector<16x128xf32> to vector<1x128xf32>
    %cst_58 = arith.constant dense<0.000000e+00> : vector<128xf32>
    %99 = vector.multi_reduction <add>, %96, %cst_58 [0] : vector<8x128xf32> to vector<128xf32>
    %100 = vector.shape_cast %99 : vector<128xf32> to vector<1x128xf32>
    %cst_59 = arith.constant 8.000000e+00 : f32
    %101 = vector.broadcast %cst_59 : f32 to vector<1x128xf32>
    %102 = arith.divf %100, %101 : vector<1x128xf32>
    %103 = arith.mulf %96, %96 : vector<8x128xf32>
    %cst_60 = arith.constant dense<0.000000e+00> : vector<128xf32>
    %104 = vector.multi_reduction <add>, %103, %cst_60 [0] : vector<8x128xf32> to vector<128xf32>
    %105 = vector.shape_cast %104 : vector<128xf32> to vector<1x128xf32>
    %cst_61 = arith.constant 8.000000e+00 : f32
    %106 = vector.broadcast %cst_61 : f32 to vector<1x128xf32>
    %107 = arith.divf %105, %106 : vector<1x128xf32>
    %108 = arith.mulf %102, %102 : vector<1x128xf32>
    %109 = arith.subf %107, %108 : vector<1x128xf32>
    %cst_62 = arith.constant 0.000000e+00 : f32
    %110 = vector.broadcast %cst_62 : f32 to vector<1x128xf32>
    %111 = arith.maximumf %109, %110 : vector<1x128xf32>
    %cst_63 = arith.constant 9.99999974E-6 : f32
    %112 = vector.broadcast %cst_63 : f32 to vector<1x128xf32>
    %113 = arith.addf %111, %112 : vector<1x128xf32>
    %114 = math.rsqrt %113 : vector<1x128xf32>
    %115 = arith.mulf %97, %114 : vector<1x128xf32>
    %116 = arith.mulf %102, %115 : vector<1x128xf32>
    %117 = arith.subf %98, %116 : vector<1x128xf32>
    %118 = vector.broadcast %115 : vector<1x128xf32> to vector<8x128xf32>
    %119 = arith.mulf %96, %118 : vector<8x128xf32>
    %120 = vector.broadcast %117 : vector<1x128xf32> to vector<8x128xf32>
    %121 = arith.addf %119, %120 : vector<8x128xf32>
    %cst_64 = arith.constant 0.000000e+00 : f32
    %122 = vector.broadcast %cst_64 : f32 to vector<8x128xf32>
    %123 = arith.maximumf %121, %122 : vector<8x128xf32>
    %c2_i32_65 = arith.constant 2 : i32
    %c0_i32_66 = arith.constant 0 : i32
    %c0_i32_67 = arith.constant 0 : i32
    %c0_i32_68 = arith.constant 0 : i32
    %c0_i32_69 = arith.constant 0 : i32
    %124 = tpu.memref_slice %arg3[%c2_i32_65, %c0_i32_68, %c0_i32_69] : memref<4x128x128xbf16, #tpu.memory_space<any>> -> memref<1x128x128xbf16, #tpu.memory_space<any>>
    %125 = tpu.memref_squeeze %124 : memref<1x128x128xbf16, #tpu.memory_space<any>> -> memref<128x128xbf16, #tpu.memory_space<any>>
    %c0_i32_70 = arith.constant 0 : i32
    %c0_i32_71 = arith.constant 0 : i32
    %126 = tpu.memref_slice %arg5[%c0_i32_66, %c0_i32_70, %c0_i32_71] : memref<2x128x128xbf16, #tpu.memory_space<vmem>> -> memref<1x128x128xbf16, #tpu.memory_space<vmem>>
    %127 = tpu.memref_squeeze %126 : memref<1x128x128xbf16, #tpu.memory_space<vmem>> -> memref<128x128xbf16, #tpu.memory_space<vmem>>
    %128 = tpu.memref_slice %arg6[%c0_i32_67] : memref<2x!tpu.dma_semaphore, #tpu.memory_space<semaphore_mem>> -> memref<1x!tpu.dma_semaphore, #tpu.memory_space<semaphore_mem>>
    %129 = tpu.memref_squeeze %128 : memref<1x!tpu.dma_semaphore, #tpu.memory_space<semaphore_mem>> -> memref<!tpu.dma_semaphore, #tpu.memory_space<semaphore_mem>>
    tpu.wait_dma2 semaphore(%129 : memref<!tpu.dma_semaphore, #tpu.memory_space<semaphore_mem>>) src(%125 : memref<128x128xbf16, #tpu.memory_space<any>>) dst(%127 : memref<128x128xbf16, #tpu.memory_space<vmem>>)
    %c3_i32 = arith.constant 3 : i32
    %c1_i32_72 = arith.constant 1 : i32
    %c1_i32_73 = arith.constant 1 : i32
    %c0_i32_74 = arith.constant 0 : i32
    %c0_i32_75 = arith.constant 0 : i32
    %130 = tpu.memref_slice %arg3[%c3_i32, %c0_i32_74, %c0_i32_75] : memref<4x128x128xbf16, #tpu.memory_space<any>> -> memref<1x128x128xbf16, #tpu.memory_space<any>>
    %131 = tpu.memref_squeeze %130 : memref<1x128x128xbf16, #tpu.memory_space<any>> -> memref<128x128xbf16, #tpu.memory_space<any>>
    %c0_i32_76 = arith.constant 0 : i32
    %c0_i32_77 = arith.constant 0 : i32
    %132 = tpu.memref_slice %arg5[%c1_i32_72, %c0_i32_76, %c0_i32_77] : memref<2x128x128xbf16, #tpu.memory_space<vmem>> -> memref<1x128x128xbf16, #tpu.memory_space<vmem>>
    %133 = tpu.memref_squeeze %132 : memref<1x128x128xbf16, #tpu.memory_space<vmem>> -> memref<128x128xbf16, #tpu.memory_space<vmem>>
    %134 = tpu.memref_slice %arg6[%c1_i32_73] : memref<2x!tpu.dma_semaphore, #tpu.memory_space<semaphore_mem>> -> memref<1x!tpu.dma_semaphore, #tpu.memory_space<semaphore_mem>>
    %135 = tpu.memref_squeeze %134 : memref<1x!tpu.dma_semaphore, #tpu.memory_space<semaphore_mem>> -> memref<!tpu.dma_semaphore, #tpu.memory_space<semaphore_mem>>
    tpu.enqueue_dma source(%131 : memref<128x128xbf16, #tpu.memory_space<any>>) target(%133 : memref<128x128xbf16, #tpu.memory_space<vmem>>) target_semaphore(%135 : memref<!tpu.dma_semaphore, #tpu.memory_space<semaphore_mem>>)
    %136 = arith.truncf %123 : vector<8x128xf32> to vector<8x128xbf16>
    %c0_78 = arith.constant 0 : index
    %c0_79 = arith.constant 0 : index
    %c0_80 = arith.constant 0 : index
    %137 = vector.load %arg5[%c0_78, %c0_79, %c0_80] : memref<2x128x128xbf16, #tpu.memory_space<vmem>>, vector<1x128x128xbf16>
    %138 = vector.shape_cast %137 : vector<1x128x128xbf16> to vector<128x128xbf16>
    %cst_81 = arith.constant dense<0.000000e+00> : vector<8x128xf32>
    %139 = tpu.matmul %136, %138, %cst_81 {dimension_numbers = #tpu.dot_dimension_numbers<[1], [0], [0], [1], [0, 0, 1, 1], [], []>} : vector<8x128xbf16>, vector<128x128xbf16>, vector<8x128xf32> -> vector<8x128xf32>
    %140 = vector.extract_strided_slice %6 {offsets = [6, 0], sizes = [1, 128], strides = [1, 1]} : vector<16x128xf32> to vector<1x128xf32>
    %141 = vector.extract_strided_slice %6 {offsets = [7, 0], sizes = [1, 128], strides = [1, 1]} : vector<16x128xf32> to vector<1x128xf32>
    %cst_82 = arith.constant dense<0.000000e+00> : vector<128xf32>
    %142 = vector.multi_reduction <add>, %139, %cst_82 [0] : vector<8x128xf32> to vector<128xf32>
    %143 = vector.shape_cast %142 : vector<128xf32> to vector<1x128xf32>
    %cst_83 = arith.constant 8.000000e+00 : f32
    %144 = vector.broadcast %cst_83 : f32 to vector<1x128xf32>
    %145 = arith.divf %143, %144 : vector<1x128xf32>
    %146 = arith.mulf %139, %139 : vector<8x128xf32>
    %cst_84 = arith.constant dense<0.000000e+00> : vector<128xf32>
    %147 = vector.multi_reduction <add>, %146, %cst_84 [0] : vector<8x128xf32> to vector<128xf32>
    %148 = vector.shape_cast %147 : vector<128xf32> to vector<1x128xf32>
    %cst_85 = arith.constant 8.000000e+00 : f32
    %149 = vector.broadcast %cst_85 : f32 to vector<1x128xf32>
    %150 = arith.divf %148, %149 : vector<1x128xf32>
    %151 = arith.mulf %145, %145 : vector<1x128xf32>
    %152 = arith.subf %150, %151 : vector<1x128xf32>
    %cst_86 = arith.constant 0.000000e+00 : f32
    %153 = vector.broadcast %cst_86 : f32 to vector<1x128xf32>
    %154 = arith.maximumf %152, %153 : vector<1x128xf32>
    %cst_87 = arith.constant 9.99999974E-6 : f32
    %155 = vector.broadcast %cst_87 : f32 to vector<1x128xf32>
    %156 = arith.addf %154, %155 : vector<1x128xf32>
    %157 = math.rsqrt %156 : vector<1x128xf32>
    %158 = arith.mulf %140, %157 : vector<1x128xf32>
    %159 = arith.mulf %145, %158 : vector<1x128xf32>
    %160 = arith.subf %141, %159 : vector<1x128xf32>
    %161 = vector.broadcast %158 : vector<1x128xf32> to vector<8x128xf32>
    %162 = arith.mulf %139, %161 : vector<8x128xf32>
    %163 = vector.broadcast %160 : vector<1x128xf32> to vector<8x128xf32>
    %164 = arith.addf %162, %163 : vector<8x128xf32>
    %cst_88 = arith.constant 0.000000e+00 : f32
    %165 = vector.broadcast %cst_88 : f32 to vector<8x128xf32>
    %166 = arith.maximumf %164, %165 : vector<8x128xf32>
    %c3_i32_89 = arith.constant 3 : i32
    %c1_i32_90 = arith.constant 1 : i32
    %c1_i32_91 = arith.constant 1 : i32
    %c0_i32_92 = arith.constant 0 : i32
    %c0_i32_93 = arith.constant 0 : i32
    %167 = tpu.memref_slice %arg3[%c3_i32_89, %c0_i32_92, %c0_i32_93] : memref<4x128x128xbf16, #tpu.memory_space<any>> -> memref<1x128x128xbf16, #tpu.memory_space<any>>
    %168 = tpu.memref_squeeze %167 : memref<1x128x128xbf16, #tpu.memory_space<any>> -> memref<128x128xbf16, #tpu.memory_space<any>>
    %c0_i32_94 = arith.constant 0 : i32
    %c0_i32_95 = arith.constant 0 : i32
    %169 = tpu.memref_slice %arg5[%c1_i32_90, %c0_i32_94, %c0_i32_95] : memref<2x128x128xbf16, #tpu.memory_space<vmem>> -> memref<1x128x128xbf16, #tpu.memory_space<vmem>>
    %170 = tpu.memref_squeeze %169 : memref<1x128x128xbf16, #tpu.memory_space<vmem>> -> memref<128x128xbf16, #tpu.memory_space<vmem>>
    %171 = tpu.memref_slice %arg6[%c1_i32_91] : memref<2x!tpu.dma_semaphore, #tpu.memory_space<semaphore_mem>> -> memref<1x!tpu.dma_semaphore, #tpu.memory_space<semaphore_mem>>
    %172 = tpu.memref_squeeze %171 : memref<1x!tpu.dma_semaphore, #tpu.memory_space<semaphore_mem>> -> memref<!tpu.dma_semaphore, #tpu.memory_space<semaphore_mem>>
    tpu.wait_dma2 semaphore(%172 : memref<!tpu.dma_semaphore, #tpu.memory_space<semaphore_mem>>) src(%168 : memref<128x128xbf16, #tpu.memory_space<any>>) dst(%170 : memref<128x128xbf16, #tpu.memory_space<vmem>>)
    %173 = arith.truncf %166 : vector<8x128xf32> to vector<8x128xbf16>
    %c1_96 = arith.constant 1 : index
    %c0_97 = arith.constant 0 : index
    %c0_98 = arith.constant 0 : index
    %174 = vector.load %arg5[%c1_96, %c0_97, %c0_98] : memref<2x128x128xbf16, #tpu.memory_space<vmem>>, vector<1x128x128xbf16>
    %175 = vector.shape_cast %174 : vector<1x128x128xbf16> to vector<128x128xbf16>
    %cst_99 = arith.constant dense<0.000000e+00> : vector<8x128xf32>
    %176 = tpu.matmul %173, %175, %cst_99 {dimension_numbers = #tpu.dot_dimension_numbers<[1], [0], [0], [1], [0, 0, 1, 1], [], []>} : vector<8x128xbf16>, vector<128x128xbf16>, vector<8x128xf32> -> vector<8x128xf32>
    %177 = vector.extract_strided_slice %6 {offsets = [8, 0], sizes = [1, 128], strides = [1, 1]} : vector<16x128xf32> to vector<1x128xf32>
    %178 = vector.broadcast %177 : vector<1x128xf32> to vector<8x128xf32>
    %179 = arith.addf %176, %178 : vector<8x128xf32>
    %180 = vector.extract_strided_slice %179 {offsets = [0, 0], sizes = [8, 4], strides = [1, 1]} : vector<8x128xf32> to vector<8x4xf32>
    %c0_100 = arith.constant 0 : index
    %c0_101 = arith.constant 0 : index
    %181 = vector.load %arg4[%c0_100, %c0_101] : memref<8x4xf32, #tpu.memory_space<vmem>>, vector<8x4xf32>
    tpu.vector_store %arg4[%c0_100, %c0_101], %180 {strides = array<i32>} : memref<8x4xf32, #tpu.memory_space<vmem>>, vector<8x4xf32>,
    return
  }
}

</mosaic_0001>

<llo_original>
// kernel: tpu_custom_call.1
$region0: #{tpu_custom_call.1}
  #allocation0 [shape = 'u32[]', space=smem, size = 0x4, offset = 0x4, fixed_abs, tag = 'smem constant byte address 0x4 - core index']
  #allocation1 [shape = 'u32[72,128]{1,0:T(1,128)}', space=vmem, size = 0x9000, scoped, tag = 'internal scratch']
  #allocation2 [shape = 'bf16[2,128,128]{2,1,0:T(8,128)(2,1)}', space=vmem, size = 0x10000, scoped, tag = 'scratch operand']
  #allocation3 [shape = 's32[2]{0}', space=sflag, size = 0x8, scoped, tag = 'scratch operand']
  #allocation9 [shape = 's32[]', space=sflag, size = 0x4, offset = 0, fixed_abs, tag = 'sflag constant byte address 0x0 - dummy sync flag']
  #allocation10 [shape = 's32[]', space=sflag, size = 0x4, offset = 0, fixed_abs, tag = 'sflag constant byte address 0x0 - dummy sync flag']
  #allocation11 [shape = 'u32[]', space=smem, size = 0x4, offset = 0x44, fixed_abs, tag = 'smem constant byte address 0x44 - assertion arg 0']
  #allocation12 [shape = 'u32[]', space=smem, size = 0x4, offset = 0x48, fixed_abs, tag = 'smem constant byte address 0x48 - assertion arg 1']
  #allocation13 [shape = 's32[]', space=sflag, size = 0x4, offset = 0, fixed_abs, tag = 'sflag constant byte address 0x0 - dummy sync flag']
  #allocation14 [shape = 's32[]', space=sflag, size = 0x4, offset = 0, fixed_abs, tag = 'sflag constant byte address 0x0 - dummy sync flag']
  #allocation15 [shape = 's32[]', space=sflag, size = 0x4, offset = 0, fixed_abs, tag = 'sflag constant byte address 0x0 - dummy sync flag']
  #allocation16 [shape = 's32[]', space=sflag, size = 0x4, offset = 0, fixed_abs, tag = 'sflag constant byte address 0x0 - dummy sync flag']
  #allocation17 [shape = 's32[]', space=sflag, size = 0x4, offset = 0, fixed_abs, tag = 'sflag constant byte address 0x0 - dummy sync flag']
  #allocation18 [shape = 's32[]', space=sflag, size = 0x4, offset = 0, fixed_abs, tag = 'sflag constant byte address 0x0 - dummy sync flag']
  %s0 = inlined_call_operand.hbm [shape: f32[8,32], index: 0, kind: input, shape index: {}]
  %s1 = inlined_call_operand.hbm [shape: bf16[32,128], index: 1, kind: input, shape index: {}]
  %s2 = inlined_call_operand.hbm [shape: f32[16,128], index: 2, kind: input, shape index: {}]
  %s3 = inlined_call_operand.hbm [shape: bf16[4,128,128], index: 3, kind: input, shape index: {}]
  %s4 = inlined_call_operand.vmem [shape: f32[8,4], index: 4, kind: output, shape index: {}]
  %s5 = sld [smem:[#allocation0]]
  $region50: #{tpu_custom_call.1} parent=0
    _
  %s7 = ssub.s32 1, %s5
  %s8 = scalar_select 0, %s7, %s5
  $region1: #{tpu_custom_call.1} parent=0
    #allocation4 [shape = 'u8[4096]{0}', space=vmem, size = 0x1000, scoped, tag = 'input window, operand 0, single buffered']
    #allocation5 [shape = 's32[1]{0}', space=sflag, size = 0x4, scoped, tag = 'scoped memory for tpu_custom_call.1']
    #allocation6 [shape = 'u8[8192]{0}', space=vmem, size = 0x2000, scoped, tag = 'input window, operand 1, single buffered']
    #allocation7 [shape = 's32[1]{0}', space=sflag, size = 0x4, scoped, tag = 'scoped memory for tpu_custom_call.1']
    #allocation8 [shape = 'u8[8192]{0}', space=vmem, size = 0x2000, scoped, tag = 'input window, operand 2, single buffered']
    %9 = vsyncpa [#allocation5], 0
    %10 = vsyncpa [#allocation7], 0
    // Predicated region
    $region2: #{tpu_custom_call.1} parent=1 // pred_check
      _
    $region3: #{tpu_custom_call.1} parent=1 // pred_check_branch
      %12 = sbr.rel (0) target = $region5
    $region4: #{tpu_custom_call.1} parent=1 // pred_region
      %14 = vsyncadd [#allocation5], 0
      %s16 = sshll.u32 %s0, 4
      %s17 = int_to_ptr.hbm [resolvable:$true] %s16
      %s18 = sshll.u32 [#allocation4], 4
      %s19 = int_to_ptr.vmem [resolvable:$true] %s18
      %21 = dma.hbm_to_vmem [thread:$0]  %s17, 128, %s19, [#allocation5]
    $region5: #{tpu_custom_call.1} parent=1 // pred_fallthru
      _
    // Predicated region
    $region6: #{tpu_custom_call.1} parent=1 // pred_check
      _
    $region7: #{tpu_custom_call.1} parent=1 // pred_check_branch
      %23 = sbr.rel (0) target = $region9
    $region8: #{tpu_custom_call.1} parent=1 // pred_region
      %25 = vsyncadd [#allocation7], 0
      %s26 = sshll.u32 %s1, 4
      %s27 = int_to_ptr.hbm [resolvable:$true] %s26
      %s28 = sshll.u32 [#allocation6], 4
      %s29 = int_to_ptr.vmem [resolvable:$true] %s28
      %34 = dma.hbm_to_vmem [thread:$0]  %s27, 256, %s29, [#allocation7], 64, 64, 4
    $region9: #{tpu_custom_call.1} parent=1 // pred_fallthru
      _
    // Predicated region
    $region10: #{tpu_custom_call.1} parent=1 // pred_check
      _
    $region11: #{tpu_custom_call.1} parent=1 // pred_check_branch
      %36 = sbr.rel (0) target = $region13
    $region12: #{tpu_custom_call.1} parent=1 // pred_region
      %38 = vsyncadd [#allocation7], 0
      %s39 = sshll.u32 %s2, 4
      %s40 = int_to_ptr.hbm [resolvable:$true] %s39
      %s41 = sshll.u32 [#allocation8], 4
      %s42 = int_to_ptr.vmem [resolvable:$true] %s41
      %47 = dma.hbm_to_vmem [thread:$0]  %s40, 256, %s42, [#allocation7], 128, 128, 8
    $region13: #{tpu_custom_call.1} parent=1 // pred_fallthru
      _
    // Predicated region
    $region14: #{tpu_custom_call.1} parent=1 // pred_check
      _
    $region15: #{tpu_custom_call.1} parent=1 // pred_check_branch
      %49 = sbr.rel (0) target = $region17
    $region16: #{tpu_custom_call.1} parent=1 // pred_region
      %51 = dma.done [#allocation5], 128
    $region17: #{tpu_custom_call.1} parent=1 // pred_fallthru
      _
    // Predicated region
    $region18: #{tpu_custom_call.1} parent=1 // pred_check
      _
    $region19: #{tpu_custom_call.1} parent=1 // pred_check_branch
      %53 = sbr.rel (0) target = $region21
    $region20: #{tpu_custom_call.1} parent=1 // pred_region
      %55 = dma.done [#allocation7], 256
    $region21: #{tpu_custom_call.1} parent=1 // pred_fallthru
      _
    // Predicated region
    $region22: #{tpu_custom_call.1} parent=1 // pred_check
      _
    $region23: #{tpu_custom_call.1} parent=1 // pred_check_branch
      %57 = sbr.rel (0) target = $region25
    $region24: #{tpu_custom_call.1} parent=1 // pred_region
      %59 = dma.done [#allocation7], 256
    $region25: #{tpu_custom_call.1} parent=1 // pred_fallthru
      _
    // Predicated region
    $region26: #{tpu_custom_call.1} parent=1 // pred_check
      _
    $region27: #{tpu_custom_call.1} parent=1 // pred_check_branch
      %62 = sbr.rel target = $region29
    $region28: #{tpu_custom_call.1} parent=1 // pred_region
      %63 = sst [smem:[#allocation11]] [#allocation10]
      %64 = sst [smem:[#allocation12]] [#allocation9]
    $region29: #{tpu_custom_call.1} parent=1 // pred_fallthru
      _
    %66 = shalt.err (0)
    %s68 = sshll.u32 %s3, 4
    %s69 = int_to_ptr.hbm [resolvable:$true] %s68
    %s70 = sshll.u32 [#allocation2], 4
    %s71 = int_to_ptr.vmem [resolvable:$true] %s70
    %73 = dma.hbm_to_vmem [thread:$0]  %s69, 1024, %s71, [#allocation3]
    %v74 = vld [vmem:[#allocation8] sm:$0xff]
    %v75 = vld [vmem:[#allocation8 + $0x8] sm:$0xff]
    %v76 = vld [vmem:[#allocation4] sm:$0xff]
    %v77 = vpack.c.bf16 %v76, %v76
    %v78 = vld [vmem:[#allocation6] sm:$0xf]
    %v79 = vld [vmem:[#allocation6 + $0x4] sm:$0xf]
    %v80 = vld [vmem:[#allocation6 + $0x8] sm:$0xf]
    %v81 = vld [vmem:[#allocation6 + $0xc] sm:$0xf]
    %v86 = vunpack.c.l.b16 %v78
    %v87 = vunpack.c.l.b16 %v79
    %v88 = vunpack.c.l.b16 %v80
    %v89 = vunpack.c.l.b16 %v81
    %v90 = vpack.c.b16 %v87, %v86
    %v91 = vpack.c.b16 %v89, %v88
    %vm94 = vcmask 261120
    %v96 = vsel %vm94, %v77, 0
    %98 = vmatpush.bf16.msra.mxu0 0
    %99 = vmatpush.bf16.msra.mxu0 0
    %100 = vmatpush.bf16.msra.mxu0 0
    %101 = vmatpush.bf16.msra.mxu0 0
    %102 = vmatpush.bf16.msra.mxu0 0
    %103 = vmatpush.bf16.msra.mxu0 0
    %104 = vmatpush.bf16.msra.mxu0 %v91
    %105 = vmatpush.bf16.msra.mxu0 %v90
    %106 = vmatmul.bf16.gmra.mxu0 %v96
    %v107 = vpop.f32.mrf.mxu0
    %v108 = vadd.f32 0.0, %v107
    %v109 = vpop.f32.mrf.mxu0
    %110 = vdwg.mxu0
    %v111 = vrot.slane %v108, 4
    %v112 = vadd.f32 %v108, %v111
    %v113 = vrot.slane %v112, 2
    %v114 = vadd.f32 %v112, %v113
    %v115 = vrot.slane %v114, 1
    %v116 = vadd.f32 %v114, %v115
    %v117 = vrcp.pop 8.0
    %v118 = vmul.f32 8.0, %v117
    %v119 = vsub.f32 1.0, %v118
    %v120 = vmul.f32 %v117, %v119
    %v121 = vadd.f32 %v117, %v120
    %vm122 = vweird.f32 %v117
    %v123 = vsel %vm122, %v117, %v121
    %v124 = vmul.f32 %v116, %v123
    %v125 = vmul.f32 %v108, %v108
    %v126 = vrot.slane %v125, 4
    %v127 = vadd.f32 %v125, %v126
    %v128 = vrot.slane %v127, 2
    %v129 = vadd.f32 %v127, %v128
    %v130 = vrot.slane %v129, 1
    %v131 = vadd.f32 %v129, %v130
    %v132 = vmul.f32 %v131, %v123
    %v133 = vmul.f32 %v124, %v124
    %v134 = vsub.f32 %v132, %v133
    %v135 = vmax.f32 %v134, 0.0
    %v136 = vadd.f32 %v135, 1e-05
    %v137 = vrsqrt.pop %v136
    %v138 = vmul.f32 %v137, %v136
    %v139 = vmul.f32 %v138, %v137
    %v140 = vmul.f32 0.5, %v139
    %v141 = vsub.f32 1.5, %v140
    %v142 = vmul.f32 %v137, %v141
    %vm143 = vweird.f32 %v136
    %vm144 = vweird.f32 %v137
    %vm145 = vmor %vm143, %vm144
    %v146 = vsel %vm145, %v137, %v142
    %v147 = vmul.f32 %v74, %v146
    %v148 = vmul.f32 %v124, %v147
    %v150 = vrot.slane %v148, 7
    %v152 = vsub.f32 %v74, %v150
    %v153 = vperm.slane %v147, 0
    %v154 = vmul.f32 %v108, %v153
    %v155 = vperm.slane %v152, 1
    %v156 = vadd.f32 %v154, %v155
    %v157 = vmax.f32 %v156, 0.0
    %s158 = smul.u32 4, 16
    %s159 = smul.u32 %s158, 1
    %s160 = sshll.u32 %s159, 4
    %161 = dma.done [#allocation3], %s160
    %s162 = scalar_lea.hbm %s3, 64
    %s163 = scalar_lea.vmem [#allocation2], 64
    %s164 = scalar_lea.sflag [#allocation3], 1
    // Predicated region
    $region30: #{tpu_custom_call.1} parent=1 // pred_check
      _
    $region31: #{tpu_custom_call.1} parent=1 // pred_check_branch
      %166 = sbr.rel target = $region33
    $region32: #{tpu_custom_call.1} parent=1 // pred_region
      %167 = sst [smem:[#allocation11]] [#allocation14]
      %168 = sst [smem:[#allocation12]] [#allocation13]
    $region33: #{tpu_custom_call.1} parent=1 // pred_fallthru
      _
    %170 = shalt.err (0)
    %s172 = sshll.u32 %s162, 4
    %s173 = int_to_ptr.hbm [resolvable:$true] %s172
    %s174 = sshll.u32 %s163, 4
    %s175 = int_to_ptr.vmem [resolvable:$true] %s174
    %177 = dma.hbm_to_vmem [thread:$0]  %s173, 1024, %s175, %s164
    %v178 = vpack.c.bf16 %v157, %v157
    %v179 = vld [vmem:[#allocation2] sm:$0xf]
    %v180 = vld [vmem:[#allocation2 + $0x4] sm:$0xf]
    %v181 = vld [vmem:[#allocation2 + $0x8] sm:$0xf]
    %v182 = vld [vmem:[#allocation2 + $0xc] sm:$0xf]
    %v183 = vld [vmem:[#allocation2 + $0x10] sm:$0xf]
    %v184 = vld [vmem:[#allocation2 + $0x14] sm:$0xf]
    %v185 = vld [vmem:[#allocation2 + $0x18] sm:$0xf]
    %v186 = vld [vmem:[#allocation2 + $0x1c] sm:$0xf]
    %v187 = vld [vmem:[#allocation2 + $0x20] sm:$0xf]
    %v188 = vld [vmem:[#allocation2 + $0x24] sm:$0xf]
    %v189 = vld [vmem:[#allocation2 + $0x28] sm:$0xf]
    %v190 = vld [vmem:[#allocation2 + $0x2c] sm:$0xf]
    %v191 = vld [vmem:[#allocation2 + $0x30] sm:$0xf]
    %v192 = vld [vmem:[#allocation2 + $0x34] sm:$0xf]
    %v193 = vld [vmem:[#allocation2 + $0x38] sm:$0xf]
    %v194 = vld [vmem:[#allocation2 + $0x3c] sm:$0xf]
    %v211 = vunpack.c.l.b16 %v179
    %v212 = vunpack.c.l.b16 %v180
    %v213 = vunpack.c.l.b16 %v181
    %v214 = vunpack.c.l.b16 %v182
    %v215 = vunpack.c.l.b16 %v183
    %v216 = vunpack.c.l.b16 %v184
    %v217 = vunpack.c.l.b16 %v185
    %v218 = vunpack.c.l.b16 %v186
    %v219 = vunpack.c.l.b16 %v187
    %v220 = vunpack.c.l.b16 %v188
    %v221 = vunpack.c.l.b16 %v189
    %v222 = vunpack.c.l.b16 %v190
    %v223 = vunpack.c.l.b16 %v191
    %v224 = vunpack.c.l.b16 %v192
    %v225 = vunpack.c.l.b16 %v193
    %v226 = vunpack.c.l.b16 %v194
    %v227 = vpack.c.b16 %v212, %v211
    %v228 = vpack.c.b16 %v214, %v213
    %v229 = vpack.c.b16 %v216, %v215
    %v230 = vpack.c.b16 %v218, %v217
    %v231 = vpack.c.b16 %v220, %v219
    %v232 = vpack.c.b16 %v222, %v221
    %v233 = vpack.c.b16 %v224, %v223
    %v234 = vpack.c.b16 %v226, %v225
    %243 = vmatpush.bf16.msra.mxu0 %v234
    %244 = vmatpush.bf16.msra.mxu0 %v233
    %245 = vmatpush.bf16.msra.mxu0 %v232
    %246 = vmatpush.bf16.msra.mxu0 %v231
    %247 = vmatpush.bf16.msra.mxu0 %v230
    %248 = vmatpush.bf16.msra.mxu0 %v229
    %249 = vmatpush.bf16.msra.mxu0 %v228
    %250 = vmatpush.bf16.msra.mxu0 %v227
    %251 = vmatmul.bf16.gmra.mxu0 %v178
    %v252 = vpop.f32.mrf.mxu0
    %v253 = vadd.f32 0.0, %v252
    %v254 = vpop.f32.mrf.mxu0
    %255 = vdwg.mxu0
    %v256 = vrot.slane %v253, 4
    %v257 = vadd.f32 %v253, %v256
    %v258 = vrot.slane %v257, 2
    %v259 = vadd.f32 %v257, %v258
    %v260 = vrot.slane %v259, 1
    %v261 = vadd.f32 %v259, %v260
    %v262 = vmul.f32 %v261, %v123
    %v263 = vmul.f32 %v253, %v253
    %v264 = vrot.slane %v263, 4
    %v265 = vadd.f32 %v263, %v264
    %v266 = vrot.slane %v265, 2
    %v267 = vadd.f32 %v265, %v266
    %v268 = vrot.slane %v267, 1
    %v269 = vadd.f32 %v267, %v268
    %v270 = vmul.f32 %v269, %v123
    %v271 = vmul.f32 %v262, %v262
    %v272 = vsub.f32 %v270, %v271
    %v273 = vmax.f32 %v272, 0.0
    %v274 = vadd.f32 %v273, 1e-05
    %v275 = vrsqrt.pop %v274
    %v276 = vmul.f32 %v275, %v274
    %v277 = vmul.f32 %v276, %v275
    %v278 = vmul.f32 0.5, %v277
    %v279 = vsub.f32 1.5, %v278
    %v280 = vmul.f32 %v275, %v279
    %vm281 = vweird.f32 %v274
    %vm282 = vweird.f32 %v275
    %vm283 = vmor %vm281, %vm282
    %v284 = vsel %vm283, %v275, %v280
    %v285 = vmul.f32 %v74, %v284
    %v286 = vmul.f32 %v262, %v285
    %v288 = vrot.slane %v286, 7
    %v290 = vsub.f32 %v74, %v288
    %v291 = vperm.slane %v285, 2
    %v292 = vmul.f32 %v253, %v291
    %v293 = vperm.slane %v290, 3
    %v294 = vadd.f32 %v292, %v293
    %v295 = vmax.f32 %v294, 0.0
    %s296 = sshll.u32 %s159, 4
    %297 = dma.done %s164, %s296
    %s298 = scalar_lea.hbm %s3, 128
    // Predicated region
    $region34: #{tpu_custom_call.1} parent=1 // pred_check
      _
    $region35: #{tpu_custom_call.1} parent=1 // pred_check_branch
      %300 = sbr.rel target = $region37
    $region36: #{tpu_custom_call.1} parent=1 // pred_region
      %301 = sst [smem:[#allocation11]] [#allocation16]
      %302 = sst [smem:[#allocation12]] [#allocation15]
    $region37: #{tpu_custom_call.1} parent=1 // pred_fallthru
      _
    %304 = shalt.err (0)
    %s306 = sshll.u32 %s298, 4
    %s307 = int_to_ptr.hbm [resolvable:$true] %s306
    %s308 = sshll.u32 [#allocation2], 4
    %s309 = int_to_ptr.vmem [resolvable:$true] %s308
    %311 = dma.hbm_to_vmem [thread:$0]  %s307, 1024, %s309, [#allocation3]
    %v312 = vpack.c.bf16 %v295, %v295
    %v313 = vld [vmem:[%s163] sm:$0xf]
    %v314 = vld [vmem:[%s163 + $0x4] sm:$0xf]
    %v315 = vld [vmem:[%s163 + $0x8] sm:$0xf]
    %v316 = vld [vmem:[%s163 + $0xc] sm:$0xf]
    %v317 = vld [vmem:[%s163 + $0x10] sm:$0xf]
    %v318 = vld [vmem:[%s163 + $0x14] sm:$0xf]
    %v319 = vld [vmem:[%s163 + $0x18] sm:$0xf]
    %v320 = vld [vmem:[%s163 + $0x1c] sm:$0xf]
    %v321 = vld [vmem:[%s163 + $0x20] sm:$0xf]
    %v322 = vld [vmem:[%s163 + $0x24] sm:$0xf]
    %v323 = vld [vmem:[%s163 + $0x28] sm:$0xf]
    %v324 = vld [vmem:[%s163 + $0x2c] sm:$0xf]
    %v325 = vld [vmem:[%s163 + $0x30] sm:$0xf]
    %v326 = vld [vmem:[%s163 + $0x34] sm:$0xf]
    %v327 = vld [vmem:[%s163 + $0x38] sm:$0xf]
    %v328 = vld [vmem:[%s163 + $0x3c] sm:$0xf]
    %v345 = vunpack.c.l.b16 %v313
    %v346 = vunpack.c.l.b16 %v314
    %v347 = vunpack.c.l.b16 %v315
    %v348 = vunpack.c.l.b16 %v316
    %v349 = vunpack.c.l.b16 %v317
    %v350 = vunpack.c.l.b16 %v318
    %v351 = vunpack.c.l.b16 %v319
    %v352 = vunpack.c.l.b16 %v320
    %v353 = vunpack.c.l.b16 %v321
    %v354 = vunpack.c.l.b16 %v322
    %v355 = vunpack.c.l.b16 %v323
    %v356 = vunpack.c.l.b16 %v324
    %v357 = vunpack.c.l.b16 %v325
    %v358 = vunpack.c.l.b16 %v326
    %v359 = vunpack.c.l.b16 %v327
    %v360 = vunpack.c.l.b16 %v328
    %v361 = vpack.c.b16 %v346, %v345
    %v362 = vpack.c.b16 %v348, %v347
    %v363 = vpack.c.b16 %v350, %v349
    %v364 = vpack.c.b16 %v352, %v351
    %v365 = vpack.c.b16 %v354, %v353
    %v366 = vpack.c.b16 %v356, %v355
    %v367 = vpack.c.b16 %v358, %v357
    %v368 = vpack.c.b16 %v360, %v359
    %377 = vmatpush.bf16.msra.mxu0 %v368
    %378 = vmatpush.bf16.msra.mxu0 %v367
    %379 = vmatpush.bf16.msra.mxu0 %v366
    %380 = vmatpush.bf16.msra.mxu0 %v365
    %381 = vmatpush.bf16.msra.mxu0 %v364
    %382 = vmatpush.bf16.msra.mxu0 %v363
    %383 = vmatpush.bf16.msra.mxu0 %v362
    %384 = vmatpush.bf16.msra.mxu0 %v361
    %385 = vmatmul.bf16.gmra.mxu0 %v312
    %v386 = vpop.f32.mrf.mxu0
    %v387 = vadd.f32 0.0, %v386
    %v388 = vpop.f32.mrf.mxu0
    %389 = vdwg.mxu0
    %v390 = vrot.slane %v387, 4
    %v391 = vadd.f32 %v387, %v390
    %v392 = vrot.slane %v391, 2
    %v393 = vadd.f32 %v391, %v392
    %v394 = vrot.slane %v393, 1
    %v395 = vadd.f32 %v393, %v394
    %v396 = vmul.f32 %v395, %v123
    %v397 = vmul.f32 %v387, %v387
    %v398 = vrot.slane %v397, 4
    %v399 = vadd.f32 %v397, %v398
    %v400 = vrot.slane %v399, 2
    %v401 = vadd.f32 %v399, %v400
    %v402 = vrot.slane %v401, 1
    %v403 = vadd.f32 %v401, %v402
    %v404 = vmul.f32 %v403, %v123
    %v405 = vmul.f32 %v396, %v396
    %v406 = vsub.f32 %v404, %v405
    %v407 = vmax.f32 %v406, 0.0
    %v408 = vadd.f32 %v407, 1e-05
    %v409 = vrsqrt.pop %v408
    %v410 = vmul.f32 %v409, %v408
    %v411 = vmul.f32 %v410, %v409
    %v412 = vmul.f32 0.5, %v411
    %v413 = vsub.f32 1.5, %v412
    %v414 = vmul.f32 %v409, %v413
    %vm415 = vweird.f32 %v408
    %vm416 = vweird.f32 %v409
    %vm417 = vmor %vm415, %vm416
    %v418 = vsel %vm417, %v409, %v414
    %v419 = vmul.f32 %v74, %v418
    %v420 = vmul.f32 %v396, %v419
    %v422 = vrot.slane %v420, 7
    %v424 = vsub.f32 %v74, %v422
    %v425 = vperm.slane %v419, 4
    %v426 = vmul.f32 %v387, %v425
    %v427 = vperm.slane %v424, 5
    %v428 = vadd.f32 %v426, %v427
    %v429 = vmax.f32 %v428, 0.0
    %s430 = sshll.u32 %s159, 4
    %431 = dma.done [#allocation3], %s430
    %s432 = scalar_lea.hbm %s3, 192
    // Predicated region
    $region38: #{tpu_custom_call.1} parent=1 // pred_check
      _
    $region39: #{tpu_custom_call.1} parent=1 // pred_check_branch
      %434 = sbr.rel target = $region41
    $region40: #{tpu_custom_call.1} parent=1 // pred_region
      %435 = sst [smem:[#allocation11]] [#allocation18]
      %436 = sst [smem:[#allocation12]] [#allocation17]
    $region41: #{tpu_custom_call.1} parent=1 // pred_fallthru
      _
    %438 = shalt.err (0)
    %s440 = sshll.u32 %s432, 4
    %s441 = int_to_ptr.hbm [resolvable:$true] %s440
    %s442 = sshll.u32 %s163, 4
    %s443 = int_to_ptr.vmem [resolvable:$true] %s442
    %445 = dma.hbm_to_vmem [thread:$0]  %s441, 1024, %s443, %s164
    %v446 = vpack.c.bf16 %v429, %v429
    %v447 = vld [vmem:[#allocation2] sm:$0xf]
    %v448 = vld [vmem:[#allocation2 + $0x4] sm:$0xf]
    %v449 = vld [vmem:[#allocation2 + $0x8] sm:$0xf]
    %v450 = vld [vmem:[#allocation2 + $0xc] sm:$0xf]
    %v451 = vld [vmem:[#allocation2 + $0x10] sm:$0xf]
    %v452 = vld [vmem:[#allocation2 + $0x14] sm:$0xf]
    %v453 = vld [vmem:[#allocation2 + $0x18] sm:$0xf]
    %v454 = vld [vmem:[#allocation2 + $0x1c] sm:$0xf]
    %v455 = vld [vmem:[#allocation2 + $0x20] sm:$0xf]
    %v456 = vld [vmem:[#allocation2 + $0x24] sm:$0xf]
    %v457 = vld [vmem:[#allocation2 + $0x28] sm:$0xf]
    %v458 = vld [vmem:[#allocation2 + $0x2c] sm:$0xf]
    %v459 = vld [vmem:[#allocation2 + $0x30] sm:$0xf]
    %v460 = vld [vmem:[#allocation2 + $0x34] sm:$0xf]
    %v461 = vld [vmem:[#allocation2 + $0x38] sm:$0xf]
    %v462 = vld [vmem:[#allocation2 + $0x3c] sm:$0xf]
    %v479 = vunpack.c.l.b16 %v447
    %v480 = vunpack.c.l.b16 %v448
    %v481 = vunpack.c.l.b16 %v449
    %v482 = vunpack.c.l.b16 %v450
    %v483 = vunpack.c.l.b16 %v451
    %v484 = vunpack.c.l.b16 %v452
    %v485 = vunpack.c.l.b16 %v453
    %v486 = vunpack.c.l.b16 %v454
    %v487 = vunpack.c.l.b16 %v455
    %v488 = vunpack.c.l.b16 %v456
    %v489 = vunpack.c.l.b16 %v457
    %v490 = vunpack.c.l.b16 %v458
    %v491 = vunpack.c.l.b16 %v459
    %v492 = vunpack.c.l.b16 %v460
    %v493 = vunpack.c.l.b16 %v461
    %v494 = vunpack.c.l.b16 %v462
    %v495 = vpack.c.b16 %v480, %v479
    %v496 = vpack.c.b16 %v482, %v481
    %v497 = vpack.c.b16 %v484, %v483
    %v498 = vpack.c.b16 %v486, %v485
    %v499 = vpack.c.b16 %v488, %v487
    %v500 = vpack.c.b16 %v490, %v489
    %v501 = vpack.c.b16 %v492, %v491
    %v502 = vpack.c.b16 %v494, %v493
    %511 = vmatpush.bf16.msra.mxu0 %v502
    %512 = vmatpush.bf16.msra.mxu0 %v501
    %513 = vmatpush.bf16.msra.mxu0 %v500
    %514 = vmatpush.bf16.msra.mxu0 %v499
    %515 = vmatpush.bf16.msra.mxu0 %v498
    %516 = vmatpush.bf16.msra.mxu0 %v497
    %517 = vmatpush.bf16.msra.mxu0 %v496
    %518 = vmatpush.bf16.msra.mxu0 %v495
    %519 = vmatmul.bf16.gmra.mxu0 %v446
    %v520 = vpop.f32.mrf.mxu0
    %v521 = vadd.f32 0.0, %v520
    %v522 = vpop.f32.mrf.mxu0
    %523 = vdwg.mxu0
    %v524 = vrot.slane %v521, 4
    %v525 = vadd.f32 %v521, %v524
    %v526 = vrot.slane %v525, 2
    %v527 = vadd.f32 %v525, %v526
    %v528 = vrot.slane %v527, 1
    %v529 = vadd.f32 %v527, %v528
    %v530 = vmul.f32 %v529, %v123
    %v531 = vmul.f32 %v521, %v521
    %v532 = vrot.slane %v531, 4
    %v533 = vadd.f32 %v531, %v532
    %v534 = vrot.slane %v533, 2
    %v535 = vadd.f32 %v533, %v534
    %v536 = vrot.slane %v535, 1
    %v537 = vadd.f32 %v535, %v536
    %v538 = vmul.f32 %v537, %v123
    %v539 = vmul.f32 %v530, %v530
    %v540 = vsub.f32 %v538, %v539
    %v541 = vmax.f32 %v540, 0.0
    %v542 = vadd.f32 %v541, 1e-05
    %v543 = vrsqrt.pop %v542
    %v544 = vmul.f32 %v543, %v542
    %v545 = vmul.f32 %v544, %v543
    %v546 = vmul.f32 0.5, %v545
    %v547 = vsub.f32 1.5, %v546
    %v548 = vmul.f32 %v543, %v547
    %vm549 = vweird.f32 %v542
    %vm550 = vweird.f32 %v543
    %vm551 = vmor %vm549, %vm550
    %v552 = vsel %vm551, %v543, %v548
    %v553 = vmul.f32 %v74, %v552
    %v554 = vmul.f32 %v530, %v553
    %v556 = vrot.slane %v554, 7
    %v558 = vsub.f32 %v74, %v556
    %v559 = vperm.slane %v553, 6
    %v560 = vmul.f32 %v521, %v559
    %v561 = vperm.slane %v558, 7
    %v562 = vadd.f32 %v560, %v561
    %v563 = vmax.f32 %v562, 0.0
    %s564 = sshll.u32 %s159, 4
    %565 = dma.done %s164, %s564
    %v566 = vpack.c.bf16 %v563, %v563
    %v567 = vld [vmem:[%s163] sm:$0xf]
    %v568 = vld [vmem:[%s163 + $0x4] sm:$0xf]
    %v569 = vld [vmem:[%s163 + $0x8] sm:$0xf]
    %v570 = vld [vmem:[%s163 + $0xc] sm:$0xf]
    %v571 = vld [vmem:[%s163 + $0x10] sm:$0xf]
    %v572 = vld [vmem:[%s163 + $0x14] sm:$0xf]
    %v573 = vld [vmem:[%s163 + $0x18] sm:$0xf]
    %v574 = vld [vmem:[%s163 + $0x1c] sm:$0xf]
    %v575 = vld [vmem:[%s163 + $0x20] sm:$0xf]
    %v576 = vld [vmem:[%s163 + $0x24] sm:$0xf]
    %v577 = vld [vmem:[%s163 + $0x28] sm:$0xf]
    %v578 = vld [vmem:[%s163 + $0x2c] sm:$0xf]
    %v579 = vld [vmem:[%s163 + $0x30] sm:$0xf]
    %v580 = vld [vmem:[%s163 + $0x34] sm:$0xf]
    %v581 = vld [vmem:[%s163 + $0x38] sm:$0xf]
    %v582 = vld [vmem:[%s163 + $0x3c] sm:$0xf]
    %v583 = vperm.slane %v75, 0
    %v600 = vunpack.c.l.b16 %v567
    %v601 = vunpack.c.l.b16 %v568
    %v602 = vunpack.c.l.b16 %v569
    %v603 = vunpack.c.l.b16 %v570
    %v604 = vunpack.c.l.b16 %v571
    %v605 = vunpack.c.l.b16 %v572
    %v606 = vunpack.c.l.b16 %v573
    %v607 = vunpack.c.l.b16 %v574
    %v608 = vunpack.c.l.b16 %v575
    %v609 = vunpack.c.l.b16 %v576
    %v610 = vunpack.c.l.b16 %v577
    %v611 = vunpack.c.l.b16 %v578
    %v612 = vunpack.c.l.b16 %v579
    %v613 = vunpack.c.l.b16 %v580
    %v614 = vunpack.c.l.b16 %v581
    %v615 = vunpack.c.l.b16 %v582
    %v616 = vpack.c.b16 %v601, %v600
    %v617 = vpack.c.b16 %v603, %v602
    %v618 = vpack.c.b16 %v605, %v604
    %v619 = vpack.c.b16 %v607, %v606
    %v620 = vpack.c.b16 %v609, %v608
    %v621 = vpack.c.b16 %v611, %v610
    %v622 = vpack.c.b16 %v613, %v612
    %v623 = vpack.c.b16 %v615, %v614
    %632 = vmatpush.bf16.msra.mxu0 %v623
    %633 = vmatpush.bf16.msra.mxu0 %v622
    %634 = vmatpush.bf16.msra.mxu0 %v621
    %635 = vmatpush.bf16.msra.mxu0 %v620
    %636 = vmatpush.bf16.msra.mxu0 %v619
    %637 = vmatpush.bf16.msra.mxu0 %v618
    %638 = vmatpush.bf16.msra.mxu0 %v617
    %639 = vmatpush.bf16.msra.mxu0 %v616
    %640 = vmatmul.bf16.gmra.mxu0 %v566
    %v641 = vpop.f32.mrf.mxu0
    %v642 = vadd.f32 %v583, %v641
    %v643 = vpop.f32.mrf.mxu0
    %644 = vdwg.mxu0
    %vm645 = vcmask 31744
    %646 = vst.msk [vmem:[%s4] sm:$0xff] %vm645, %v642
    // Predicated region
    $region42: #{tpu_custom_call.1} parent=1 // pred_check
      _
    $region43: #{tpu_custom_call.1} parent=1 // pred_check_branch
      %648 = sbr.rel (0) target = $region45
    $region44: #{tpu_custom_call.1} parent=1 // pred_region
      _
    $region45: #{tpu_custom_call.1} parent=1 // pred_fallthru
      _
    // Predicated region
    $region46: #{tpu_custom_call.1} parent=1 // pred_check
      _
    $region47: #{tpu_custom_call.1} parent=1 // pred_check_branch
      %650 = sbr.rel (0) target = $region49
    $region48: #{tpu_custom_call.1} parent=1 // pred_region
      _
    $region49: #{tpu_custom_call.1} parent=1 // pred_fallthru
      _
    %651 = vsyncpa [#allocation5], 1
    %652 = vsyncpa [#allocation7], 1
  %653 = vsyncmov [#allocation3]
  %s654 = vpop.sfrf %653
  %p655 = scmp.eq.s32.totalorder %s654, 0
  %p656 = pneg %p655
  %658 = shalt.err (%p656)
  %s659 = scalar_lea.sflag [#allocation3], 1
  %660 = vsyncmov %s659
  %s661 = vpop.sfrf %660
  %p662 = scmp.eq.s32.totalorder %s661, 0
  %p663 = pneg %p662
  %665 = shalt.err (%p663)

</llo_original>
